<compile_context>
chip_gen: v7x
topology: tpu7x:2x2x1
jax: 0.10.0
libtpu: 0.0.40
codegen_flags: <defaults>
</compile_context>

<pallas_src>
import functools

import jax
import jax.numpy as jnp
import numpy as np
from jax.experimental import pallas as pl
from jax.experimental.pallas import tpu as pltpu

_LANES = 128                        # vreg lane width
_SUBLANES = 8                       # f32 sublane packing
_MAX_TR = 2048                      # max sublane rows per tile (1 MiB / buffer)
_VMEM_BUDGET = 16 * 1024 * 1024     # target live (double-buffered) VMEM


def _cdiv(a, b):
    return -(-a // b)


def _round_up(a, b):
    return _cdiv(a, b) * b


def _spectrum_kernel(re_ref, im_ref, w1_ref, b1_ref, w2_ref, b2_ref,
                     ore_ref, oim_ref, *, log):
    re = re_ref[...]
    im = im_ref[...]
    # activation(...) is applied to the parameters themselves (ReLU), exactly
    # as in the PyTorch module.  This stage is HBM-bound, so the extra VALU
    # work is free filler.  Params are (1, TR, 128) and broadcast over the
    # (folded) batch dim of the data blocks.
    w1 = jnp.maximum(w1_ref[...], 0.0)
    b1 = jnp.maximum(b1_ref[...], 0.0)
    w2 = jnp.maximum(w2_ref[...], 0.0)
    b2 = jnp.maximum(b2_ref[...], 0.0)

    # |X|^2 plus one EUP rsqrt gives both the magnitude and the 1/|X| factor.
    # The tiny eps keeps the zero-padded tail (and exact zeros) finite; there
    # the zero-padded params force spectrum == 0, so scale is exactly 0.
    msq = re * re + im * im
    rs = jax.lax.rsqrt(msq + 1e-30)
    init_spectrum = msq * rs                      # == sqrt(msq) for msq >> eps

    if log:
        inner = w1 * jnp.log1p(init_spectrum) + b1
    else:
        inner = w1 * init_spectrum + b1
    spectrum = w2 * jnp.maximum(inner, 0.0) + b2

    scale = spectrum * rs                         # == spectrum / |X|
    ore_ref[...] = re * scale
    oim_ref[...] = im * scale


def _choose_tiling(n, r):
    """Pick (batch rows per block, sublane rows per tile, #spectral tiles)."""
    def tr_cap(bn):
        # live VMEM ~= 2 buffers x (4 data blocks x bn + 4 param blocks x 1)
        #              x tr rows x 128 lanes x 4 B = 4096 * (bn + 1) * tr bytes
        cap = _VMEM_BUDGET // (4096 * (bn + 1))
        return max(_SUBLANES, (cap // _SUBLANES) * _SUBLANES)

    # Fold the whole batch into the block when doing so does not starve the
    # tile size (main win for small N: removes the inner batch grid loop).
    fold = tr_cap(n) >= min(r, 64)
    bn = n if fold else 1

    tr = min(r, _MAX_TR, tr_cap(bn))
    num_tiles = _cdiv(r, tr)

    # Megacore (v7x, 2 TCs/chip): make sure the all-parallel grid has >= 2
    # steps whenever the spectral axis is big enough to split.
    steps = num_tiles * (1 if fold else n)
    if steps < 2 and r >= 2 * _SUBLANES:
        num_tiles = 2

    tr = _round_up(_cdiv(r, num_tiles), _SUBLANES)
    return bn, tr, num_tiles


def _spectrum_filter_pallas(re, im, w1, b1, w2, b2, *, log):
    """re, im: (N, C, H, Wf) f32.  w*, b*: (1, C, H, Wf) f32 (broadcast over N)."""
    n, c, h, wf = re.shape
    L = c * h * wf
    r = _round_up(_cdiv(L, _LANES), _SUBLANES)    # 128-lane rows per batch elem

    bn, tr, num_tiles = _choose_tiling(n, r)
    r_pad = num_tiles * tr
    l_pad = r_pad * _LANES

    def _prep(a, lead):
        flat = a.reshape(lead, L)
        if l_pad != L:
            # TODO(synk): the ragged tail could be masked in-kernel instead of
            # zero-padded, but this pad fuses with the real/imag producer and
            # the zero-padded params force scale == 0 on the tail.
            flat = jnp.pad(flat, ((0, 0), (0, l_pad - L)))
        return flat.reshape(lead, r_pad, _LANES)

    re_p = _prep(re, n)
    im_p = _prep(im, n)
    w1_p = _prep(w1, 1)
    b1_p = _prep(b1, 1)
    w2_p = _prep(w2, 1)
    b2_p = _prep(b2, 1)

    if bn == n:
        # Whole batch folded into one block: grid over spectral tiles only.
        grid = (num_tiles,)
        data_spec = pl.BlockSpec((n, tr, _LANES), lambda t: (0, t, 0))
        param_spec = pl.BlockSpec((1, tr, _LANES), lambda t: (0, t, 0))
        dims = ("parallel",)
    else:
        # Tile axis outermost so the broadcast parameter blocks stay resident
        # across the inner batch loop; both axes parallel for megacore.
        grid = (num_tiles, n)
        data_spec = pl.BlockSpec((1, tr, _LANES), lambda t, b: (b, t, 0))
        param_spec = pl.BlockSpec((1, tr, _LANES), lambda t, b: (0, t, 0))
        dims = ("parallel", "parallel")

    out_re, out_im = pl.pallas_call(
        functools.partial(_spectrum_kernel, log=log),
        out_shape=(
            jax.ShapeDtypeStruct((n, r_pad, _LANES), jnp.float32),
            jax.ShapeDtypeStruct((n, r_pad, _LANES), jnp.float32),
        ),
        grid=grid,
        in_specs=[data_spec, data_spec,
                  param_spec, param_spec, param_spec, param_spec],
        out_specs=(data_spec, data_spec),
        input_output_aliases={0: 0, 1: 1},   # in-place rescale of re / im
        compiler_params=pltpu.CompilerParams(
            dimension_semantics=dims,
            vmem_limit_bytes=32 * 1024 * 1024),
    )(re_p, im_p, w1_p, b1_p, w2_p, b2_p)

    def _unprep(o):
        return o.reshape(n, l_pad)[:, :L].reshape(n, c, h, wf)

    return _unprep(out_re), _unprep(out_im)


@functools.partial(jax.jit, static_argnames=("log",))
def general_fourier2d(x, W1, B1, W2, B2, *, log=False):
    """Forward pass of GeneralFourier2d.

    x: (N, C, H, W) float32 (NCHW, same as the PyTorch module)
    W1/B1/W2/B2: (1, C, H, W//2 + 1, 1) float32
    returns: (N, C, H, W) float32
    """
    n, c, h, w = x.shape
    # torch.rfft(signal_ndim=3, normalized=True, onesided=True)
    #   == rfftn over (C, H, W), orthonormal scaling, one-sided on W.
    # TODO(synk): FFT has no Pallas equivalent; it stays in XLA.
    rft = jnp.fft.rfftn(x.astype(jnp.float32), axes=(1, 2, 3), norm="ortho")
    # TODO(synk): feeding the kernel the interleaved complex spectrum directly
    # (dropping the real/imag split + complex recombine HBM passes) needs a
    # complex64<->f32 bitcast, which XLA's bitcast-convert disallows; the
    # split/recombine is left to XLA producer/consumer fusions instead.
    re = jnp.real(rft).astype(jnp.float32)
    im = jnp.imag(rft).astype(jnp.float32)

    # Drop the trailing singleton (real/imag broadcast) axis of the params.
    w1 = W1[..., 0]
    b1 = B1[..., 0]
    w2 = W2[..., 0]
    b2 = B2[..., 0]

    out_re, out_im = _spectrum_filter_pallas(re, im, w1, b1, w2, b2, log=log)

    filtered = jax.lax.complex(out_re, out_im)
    # torch.irfft(..., normalized=True, onesided=True, signal_sizes=x.shape[1:])
    irf = jnp.fft.irfftn(filtered, s=(c, h, w), axes=(1, 2, 3), norm="ortho")
    return irf.astype(jnp.float32)


def _reference(x, W1, B1, W2, B2, *, log=False):
    """Pure-JAX reference mirroring the PyTorch forward exactly."""
    n, c, h, w = x.shape
    rft = jnp.fft.rfftn(x.astype(jnp.float32), axes=(1, 2, 3), norm="ortho")
    re = jnp.real(rft)
    im = jnp.imag(rft)
    w1 = jax.nn.relu(W1[..., 0])
    b1 = jax.nn.relu(B1[..., 0])
    w2 = jax.nn.relu(W2[..., 0])
    b2 = jax.nn.relu(B2[..., 0])
    init_spectrum = jnp.sqrt(re * re + im * im)
    if log:
        spectrum = w2 * jax.nn.relu(w1 * jnp.log1p(init_spectrum) + b1) + b2
    else:
        spectrum = w2 * jax.nn.relu(w1 * init_spectrum + b1) + b2
    scale = spectrum / (init_spectrum + 1e-16)
    filtered = (re * scale) + 1j * (im * scale)
    return jnp.fft.irfftn(filtered, s=(c, h, w), axes=(1, 2, 3),
                          norm="ortho").astype(jnp.float32)


if __name__ == "__main__":
    N, C, H, W = 2, 4, 16, 16
    WF = W // 2 + 1

    key = jax.random.PRNGKey(0)
    kx, k1, k2, k3, k4 = jax.random.split(key, 5)

    x = jax.random.normal(kx, (N, C, H, W), dtype=jnp.float32)

    # Module defaults (ones / zeros) perturbed so the filter is non-trivial.
    W1 = jnp.ones((1, C, H, WF, 1), jnp.float32) + 0.1 * jax.random.normal(
        k1, (1, C, H, WF, 1), dtype=jnp.float32)
    B1 = 0.1 * jax.random.normal(k2, (1, C, H, WF, 1), dtype=jnp.float32)
    W2 = jnp.ones((1, C, H, WF, 1), jnp.float32) + 0.1 * jax.random.normal(
        k3, (1, C, H, WF, 1), dtype=jnp.float32)
    B2 = 0.1 * jax.random.normal(k4, (1, C, H, WF, 1), dtype=jnp.float32)

    for use_log in (False, True):
        out = jax.block_until_ready(
            general_fourier2d(x, W1, B1, W2, B2, log=use_log))
        ref = jax.block_until_ready(
            _reference(x, W1, B1, W2, B2, log=use_log))
        np.testing.assert_allclose(np.asarray(out), np.asarray(ref),
                                   rtol=1e-4, atol=1e-4)

    print("KERNEL_OK")
</pallas_src>

<mosaic_0001>
module attributes {stable_mosaic.version = 11 : i64} {
  func.func @_spectrum_kernel(%arg0: i32, %arg1: memref<2x8x128xf32, #tpu.memory_space<vmem>>, %arg2: memref<2x8x128xf32, #tpu.memory_space<vmem>>, %arg3: memref<1x8x128xf32, #tpu.memory_space<vmem>>, %arg4: memref<1x8x128xf32, #tpu.memory_space<vmem>>, %arg5: memref<1x8x128xf32, #tpu.memory_space<vmem>>, %arg6: memref<1x8x128xf32, #tpu.memory_space<vmem>>, %arg7: memref<2x8x128xf32, #tpu.memory_space<vmem>>, %arg8: memref<2x8x128xf32, #tpu.memory_space<vmem>>) attributes {dimension_semantics = [#tpu.dimension_semantics<parallel>], iteration_bounds = array<i64: 1>, scalar_prefetch = 0 : i64, scratch_operands = 0 : i64, tpu.core_type = #tpu.core_type<tc>, window_params = [{transform_indices = @transform_0, window_bounds = array<i64: 2, 8, 128>}, {transform_indices = @transform_1, window_bounds = array<i64: 2, 8, 128>}, {transform_indices = @transform_2, window_bounds = array<i64: 1, 8, 128>}, {transform_indices = @transform_3, window_bounds = array<i64: 1, 8, 128>}, {transform_indices = @transform_4, window_bounds = array<i64: 1, 8, 128>}, {transform_indices = @transform_5, window_bounds = array<i64: 1, 8, 128>}, {transform_indices = @transform_6, window_bounds = array<i64: 2, 8, 128>}, {transform_indices = @transform_7, window_bounds = array<i64: 2, 8, 128>}]} {
    %c0 = arith.constant 0 : index
    %c0_0 = arith.constant 0 : index
    %c0_1 = arith.constant 0 : index
    %0 = vector.load %arg1[%c0, %c0_0, %c0_1] : memref<2x8x128xf32, #tpu.memory_space<vmem>>, vector<2x8x128xf32>
    %c0_2 = arith.constant 0 : index
    %c0_3 = arith.constant 0 : index
    %c0_4 = arith.constant 0 : index
    %1 = vector.load %arg2[%c0_2, %c0_3, %c0_4] : memref<2x8x128xf32, #tpu.memory_space<vmem>>, vector<2x8x128xf32>
    %c0_5 = arith.constant 0 : index
    %c0_6 = arith.constant 0 : index
    %c0_7 = arith.constant 0 : index
    %2 = vector.load %arg3[%c0_5, %c0_6, %c0_7] : memref<1x8x128xf32, #tpu.memory_space<vmem>>, vector<1x8x128xf32>
    %cst = arith.constant 0.000000e+00 : f32
    %3 = vector.broadcast %cst : f32 to vector<1x8x128xf32>
    %4 = arith.maximumf %2, %3 : vector<1x8x128xf32>
    %c0_8 = arith.constant 0 : index
    %c0_9 = arith.constant 0 : index
    %c0_10 = arith.constant 0 : index
    %5 = vector.load %arg4[%c0_8, %c0_9, %c0_10] : memref<1x8x128xf32, #tpu.memory_space<vmem>>, vector<1x8x128xf32>
    %cst_11 = arith.constant 0.000000e+00 : f32
    %6 = vector.broadcast %cst_11 : f32 to vector<1x8x128xf32>
    %7 = arith.maximumf %5, %6 : vector<1x8x128xf32>
    %c0_12 = arith.constant 0 : index
    %c0_13 = arith.constant 0 : index
    %c0_14 = arith.constant 0 : index
    %8 = vector.load %arg5[%c0_12, %c0_13, %c0_14] : memref<1x8x128xf32, #tpu.memory_space<vmem>>, vector<1x8x128xf32>
    %cst_15 = arith.constant 0.000000e+00 : f32
    %9 = vector.broadcast %cst_15 : f32 to vector<1x8x128xf32>
    %10 = arith.maximumf %8, %9 : vector<1x8x128xf32>
    %c0_16 = arith.constant 0 : index
    %c0_17 = arith.constant 0 : index
    %c0_18 = arith.constant 0 : index
    %11 = vector.load %arg6[%c0_16, %c0_17, %c0_18] : memref<1x8x128xf32, #tpu.memory_space<vmem>>, vector<1x8x128xf32>
    %cst_19 = arith.constant 0.000000e+00 : f32
    %12 = vector.broadcast %cst_19 : f32 to vector<1x8x128xf32>
    %13 = arith.maximumf %11, %12 : vector<1x8x128xf32>
    %14 = arith.mulf %0, %0 : vector<2x8x128xf32>
    %15 = arith.mulf %1, %1 : vector<2x8x128xf32>
    %16 = arith.addf %14, %15 : vector<2x8x128xf32>
    %cst_20 = arith.constant 1.000000e-30 : f32
    %17 = vector.broadcast %cst_20 : f32 to vector<2x8x128xf32>
    %18 = arith.addf %16, %17 : vector<2x8x128xf32>
    %19 = math.rsqrt %18 : vector<2x8x128xf32>
    %20 = arith.mulf %16, %19 : vector<2x8x128xf32>
    %21 = vector.broadcast %4 : vector<1x8x128xf32> to vector<2x8x128xf32>
    %22 = arith.mulf %21, %20 : vector<2x8x128xf32>
    %23 = vector.broadcast %7 : vector<1x8x128xf32> to vector<2x8x128xf32>
    %24 = arith.addf %22, %23 : vector<2x8x128xf32>
    %cst_21 = arith.constant 0.000000e+00 : f32
    %25 = vector.broadcast %cst_21 : f32 to vector<2x8x128xf32>
    %26 = arith.maximumf %24, %25 : vector<2x8x128xf32>
    %27 = vector.broadcast %10 : vector<1x8x128xf32> to vector<2x8x128xf32>
    %28 = arith.mulf %27, %26 : vector<2x8x128xf32>
    %29 = vector.broadcast %13 : vector<1x8x128xf32> to vector<2x8x128xf32>
    %30 = arith.addf %28, %29 : vector<2x8x128xf32>
    %31 = arith.mulf %30, %19 : vector<2x8x128xf32>
    %32 = arith.mulf %0, %31 : vector<2x8x128xf32>
    %c0_22 = arith.constant 0 : index
    %c0_23 = arith.constant 0 : index
    %c0_24 = arith.constant 0 : index
    %33 = vector.load %arg7[%c0_22, %c0_23, %c0_24] : memref<2x8x128xf32, #tpu.memory_space<vmem>>, vector<2x8x128xf32>
    tpu.vector_store %arg7[%c0_22, %c0_23, %c0_24], %32 {strides = array<i32>} : memref<2x8x128xf32, #tpu.memory_space<vmem>>, vector<2x8x128xf32>,
    %34 = arith.mulf %1, %31 : vector<2x8x128xf32>
    %c0_25 = arith.constant 0 : index
    %c0_26 = arith.constant 0 : index
    %c0_27 = arith.constant 0 : index
    %35 = vector.load %arg8[%c0_25, %c0_26, %c0_27] : memref<2x8x128xf32, #tpu.memory_space<vmem>>, vector<2x8x128xf32>
    tpu.vector_store %arg8[%c0_25, %c0_26, %c0_27], %34 {strides = array<i32>} : memref<2x8x128xf32, #tpu.memory_space<vmem>>, vector<2x8x128xf32>,
    return
  }
  func.func @transform_0(%arg0: i32) -> (i32, i32, i32) {
    %c0_i32 = arith.constant 0 : i32
    %c0_i32_0 = arith.constant 0 : i32
    %c0_i32_1 = arith.constant 0 : i32
    return %c0_i32, %arg0, %c0_i32_0 : i32, i32, i32
  }
  func.func @transform_1(%arg0: i32) -> (i32, i32, i32) {
    %c0_i32 = arith.constant 0 : i32
    %c0_i32_0 = arith.constant 0 : i32
    %c0_i32_1 = arith.constant 0 : i32
    return %c0_i32, %arg0, %c0_i32_0 : i32, i32, i32
  }
  func.func @transform_2(%arg0: i32) -> (i32, i32, i32) {
    %c0_i32 = arith.constant 0 : i32
    %c0_i32_0 = arith.constant 0 : i32
    %c0_i32_1 = arith.constant 0 : i32
    return %c0_i32, %arg0, %c0_i32_0 : i32, i32, i32
  }
  func.func @transform_3(%arg0: i32) -> (i32, i32, i32) {
    %c0_i32 = arith.constant 0 : i32
    %c0_i32_0 = arith.constant 0 : i32
    %c0_i32_1 = arith.constant 0 : i32
    return %c0_i32, %arg0, %c0_i32_0 : i32, i32, i32
  }
  func.func @transform_4(%arg0: i32) -> (i32, i32, i32) {
    %c0_i32 = arith.constant 0 : i32
    %c0_i32_0 = arith.constant 0 : i32
    %c0_i32_1 = arith.constant 0 : i32
    return %c0_i32, %arg0, %c0_i32_0 : i32, i32, i32
  }
  func.func @transform_5(%arg0: i32) -> (i32, i32, i32) {
    %c0_i32 = arith.constant 0 : i32
    %c0_i32_0 = arith.constant 0 : i32
    %c0_i32_1 = arith.constant 0 : i32
    return %c0_i32, %arg0, %c0_i32_0 : i32, i32, i32
  }
  func.func @transform_6(%arg0: i32) -> (i32, i32, i32) {
    %c0_i32 = arith.constant 0 : i32
    %c0_i32_0 = arith.constant 0 : i32
    %c0_i32_1 = arith.constant 0 : i32
    return %c0_i32, %arg0, %c0_i32_0 : i32, i32, i32
  }
  func.func @transform_7(%arg0: i32) -> (i32, i32, i32) {
    %c0_i32 = arith.constant 0 : i32
    %c0_i32_0 = arith.constant 0 : i32
    %c0_i32_1 = arith.constant 0 : i32
    return %c0_i32, %arg0, %c0_i32_0 : i32, i32, i32
  }
}

</mosaic_0001>

<llo_original>
// kernel: squeeze.4
$region0: #{squeeze.4}
  %s0 = inlined_call_operand.vmem [shape: f32[1,4,16,9,1], index: 0, kind: input, shape index: {}]
  %s1 = inlined_call_operand.vmem [shape: f32[1,576], index: 1, kind: output, shape index: {}]
  $region1: #{squeeze.4} parent=0
    #allocation0 [shape = 'u8[20480]{0}', space=vmem, size = 0x5000, scoped, tag = 'scoped mem for output reshape']
    %v2 = vld [vmem:[%s0] sm:$0x1]
    %vm3 = vcmask 72704
    %4 = vst.msk [vmem:[#allocation0] sm:$0x1] %vm3, %v2
    %s5 = scalar_lea.vmem %s0, 14
    %v6 = vld [vmem:[%s5] sm:$0x1]
    %s7 = scalar_lea.vmem %s0, 14
    %v8 = vld [vmem:[%s7] sm:$0x1]
    %vm9 = vcmask 15360
    %v10 = vsel %vm9, %v8, %v6
    %11 = vrot.lane.b32.xlu0 %v10, 126
    %v12 = vpop.permute.xlu0 %11
    %vm13 = vcmask 56320
    %s14 = scalar_lea.vmem [#allocation0], 8
    %15 = vst.msk [vmem:[%s14] sm:$0x1] %vm13, %v12
    %vm16 = vcmask 1048560
    %17 = vst.msk [vmem:[#allocation0] sm:$0x1] %vm16, %v12
    %s18 = scalar_lea.vmem %s0, 28
    %v19 = vld [vmem:[%s18] sm:$0x1]
    %s20 = scalar_lea.vmem %s0, 28
    %v21 = vld [vmem:[%s20] sm:$0x1]
    %vm22 = vcmask 31744
    %v23 = vsel %vm22, %v21, %v19
    %24 = vrot.lane.b32.xlu0 %v23, 124
    %v25 = vpop.permute.xlu0 %24
    %vm26 = vcmask 39936
    %s27 = scalar_lea.vmem [#allocation0], 16
    %28 = vst.msk [vmem:[%s27] sm:$0x1] %vm26, %v25
    %vm29 = vcmask 1048544
    %s30 = scalar_lea.vmem [#allocation0], 8
    %31 = vst.msk [vmem:[%s30] sm:$0x1] %vm29, %v25
    %s32 = scalar_lea.vmem %s0, 42
    %v33 = vld [vmem:[%s32] sm:$0x1]
    %s34 = scalar_lea.vmem %s0, 42
    %v35 = vld [vmem:[%s34] sm:$0x1]
    %vm36 = vcmask 48128
    %v37 = vsel %vm36, %v35, %v33
    %38 = vrot.lane.b32.xlu0 %v37, 122
    %v39 = vpop.permute.xlu0 %38
    %vm40 = vcmask 23552
    %s41 = scalar_lea.vmem [#allocation0], 24
    %42 = vst.msk [vmem:[%s41] sm:$0x1] %vm40, %v39
    %vm43 = vcmask 1048528
    %s44 = scalar_lea.vmem [#allocation0], 16
    %45 = vst.msk [vmem:[%s44] sm:$0x1] %vm43, %v39
    %s46 = scalar_lea.vmem %s0, 56
    %v47 = vld [vmem:[%s46] sm:$0x1]
    %s48 = scalar_lea.vmem %s0, 56
    %v49 = vld [vmem:[%s48] sm:$0x1]
    %vm50 = vcmask 64512
    %v51 = vsel %vm50, %v49, %v47
    %52 = vrot.lane.b32.xlu0 %v51, 120
    %v53 = vpop.permute.xlu0 %52
    %vm54 = vcmask 7168
    %s55 = scalar_lea.vmem [#allocation0], 32
    %56 = vst.msk [vmem:[%s55] sm:$0x1] %vm54, %v53
    %vm57 = vcmask 1048512
    %s58 = scalar_lea.vmem [#allocation0], 24
    %59 = vst.msk [vmem:[%s58] sm:$0x1] %vm57, %v53
    %s60 = scalar_lea.vmem %s0, 13
    %v61 = vld [vmem:[%s60] sm:$0x1]
    %62 = vrot.lane.b32.xlu0 %v61, 117
    %v63 = vpop.permute.xlu0 %62
    %vm64 = vcmask 1032104
    %65 = vst.msk [vmem:[#allocation0] sm:$0x1] %vm64, %v63
    %s66 = scalar_lea.vmem %s0, 27
    %v67 = vld [vmem:[%s66] sm:$0x1]
    %68 = vrot.lane.b32.xlu0 %v67, 115
    %v69 = vpop.permute.xlu0 %68
    %vm70 = vcmask 1015704
    %s71 = scalar_lea.vmem [#allocation0], 8
    %72 = vst.msk [vmem:[%s71] sm:$0x1] %vm70, %v69
    %s73 = scalar_lea.vmem %s0, 41
    %v74 = vld [vmem:[%s73] sm:$0x1]
    %75 = vrot.lane.b32.xlu0 %v74, 113
    %v76 = vpop.permute.xlu0 %75
    %vm77 = vcmask 999304
    %s78 = scalar_lea.vmem [#allocation0], 16
    %79 = vst.msk [vmem:[%s78] sm:$0x1] %vm77, %v76
    %s80 = scalar_lea.vmem %s0, 55
    %v81 = vld [vmem:[%s80] sm:$0x1]
    %82 = vrot.lane.b32.xlu0 %v81, 111
    %v83 = vpop.permute.xlu0 %82
    %vm84 = vcmask 982904
    %s85 = scalar_lea.vmem [#allocation0], 24
    %86 = vst.msk [vmem:[%s85] sm:$0x1] %vm84, %v83
    %s87 = scalar_lea.vmem %s0, 12
    %v88 = vld [vmem:[%s87] sm:$0x1]
    %89 = vrot.lane.b32.xlu0 %v88, 108
    %v90 = vpop.permute.xlu0 %89
    %vm91 = vcmask 958304
    %92 = vst.msk [vmem:[#allocation0] sm:$0x1] %vm91, %v90
    %s93 = scalar_lea.vmem %s0, 26
    %v94 = vld [vmem:[%s93] sm:$0x1]
    %95 = vrot.lane.b32.xlu0 %v94, 106
    %v96 = vpop.permute.xlu0 %95
    %vm97 = vcmask 941904
    %s98 = scalar_lea.vmem [#allocation0], 8
    %99 = vst.msk [vmem:[%s98] sm:$0x1] %vm97, %v96
    %s100 = scalar_lea.vmem %s0, 40
    %v101 = vld [vmem:[%s100] sm:$0x1]
    %102 = vrot.lane.b32.xlu0 %v101, 104
    %v103 = vpop.permute.xlu0 %102
    %vm104 = vcmask 925504
    %s105 = scalar_lea.vmem [#allocation0], 16
    %106 = vst.msk [vmem:[%s105] sm:$0x1] %vm104, %v103
    %s107 = scalar_lea.vmem %s0, 54
    %v108 = vld [vmem:[%s107] sm:$0x1]
    %109 = vrot.lane.b32.xlu0 %v108, 102
    %v110 = vpop.permute.xlu0 %109
    %vm111 = vcmask 909104
    %s112 = scalar_lea.vmem [#allocation0], 24
    %113 = vst.msk [vmem:[%s112] sm:$0x1] %vm111, %v110
    %s114 = scalar_lea.vmem %s0, 11
    %v115 = vld [vmem:[%s114] sm:$0x1]
    %116 = vrot.lane.b32.xlu0 %v115, 99
    %v117 = vpop.permute.xlu0 %116
    %vm118 = vcmask 884504
    %119 = vst.msk [vmem:[#allocation0] sm:$0x1] %vm118, %v117
    %s120 = scalar_lea.vmem %s0, 25
    %v121 = vld [vmem:[%s120] sm:$0x1]
    %122 = vrot.lane.b32.xlu0 %v121, 97
    %v123 = vpop.permute.xlu0 %122
    %vm124 = vcmask 868104
    %s125 = scalar_lea.vmem [#allocation0], 8
    %126 = vst.msk [vmem:[%s125] sm:$0x1] %vm124, %v123
    %s127 = scalar_lea.vmem %s0, 39
    %v128 = vld [vmem:[%s127] sm:$0x1]
    %129 = vrot.lane.b32.xlu0 %v128, 95
    %v130 = vpop.permute.xlu0 %129
    %vm131 = vcmask 851704
    %s132 = scalar_lea.vmem [#allocation0], 16
    %133 = vst.msk [vmem:[%s132] sm:$0x1] %vm131, %v130
    %s134 = scalar_lea.vmem %s0, 53
    %v135 = vld [vmem:[%s134] sm:$0x1]
    %136 = vrot.lane.b32.xlu0 %v135, 93
    %v137 = vpop.permute.xlu0 %136
    %vm138 = vcmask 835304
    %s139 = scalar_lea.vmem [#allocation0], 24
    %140 = vst.msk [vmem:[%s139] sm:$0x1] %vm138, %v137
    %s141 = scalar_lea.vmem %s0, 10
    %v142 = vld [vmem:[%s141] sm:$0x1]
    %143 = vrot.lane.b32.xlu0 %v142, 90
    %v144 = vpop.permute.xlu0 %143
    %vm145 = vcmask 810704
    %146 = vst.msk [vmem:[#allocation0] sm:$0x1] %vm145, %v144
    %s147 = scalar_lea.vmem %s0, 24
    %v148 = vld [vmem:[%s147] sm:$0x1]
    %149 = vrot.lane.b32.xlu0 %v148, 88
    %v150 = vpop.permute.xlu0 %149
    %vm151 = vcmask 794304
    %s152 = scalar_lea.vmem [#allocation0], 8
    %153 = vst.msk [vmem:[%s152] sm:$0x1] %vm151, %v150
    %s154 = scalar_lea.vmem %s0, 38
    %v155 = vld [vmem:[%s154] sm:$0x1]
    %156 = vrot.lane.b32.xlu0 %v155, 86
    %v157 = vpop.permute.xlu0 %156
    %vm158 = vcmask 777904
    %s159 = scalar_lea.vmem [#allocation0], 16
    %160 = vst.msk [vmem:[%s159] sm:$0x1] %vm158, %v157
    %s161 = scalar_lea.vmem %s0, 52
    %v162 = vld [vmem:[%s161] sm:$0x1]
    %163 = vrot.lane.b32.xlu0 %v162, 84
    %v164 = vpop.permute.xlu0 %163
    %vm165 = vcmask 761504
    %s166 = scalar_lea.vmem [#allocation0], 24
    %167 = vst.msk [vmem:[%s166] sm:$0x1] %vm165, %v164
    %s168 = scalar_lea.vmem %s0, 9
    %v169 = vld [vmem:[%s168] sm:$0x1]
    %170 = vrot.lane.b32.xlu0 %v169, 81
    %v171 = vpop.permute.xlu0 %170
    %vm172 = vcmask 736904
    %173 = vst.msk [vmem:[#allocation0] sm:$0x1] %vm172, %v171
    %s174 = scalar_lea.vmem %s0, 23
    %v175 = vld [vmem:[%s174] sm:$0x1]
    %176 = vrot.lane.b32.xlu0 %v175, 79
    %v177 = vpop.permute.xlu0 %176
    %vm178 = vcmask 720504
    %s179 = scalar_lea.vmem [#allocation0], 8
    %180 = vst.msk [vmem:[%s179] sm:$0x1] %vm178, %v177
    %s181 = scalar_lea.vmem %s0, 37
    %v182 = vld [vmem:[%s181] sm:$0x1]
    %183 = vrot.lane.b32.xlu0 %v182, 77
    %v184 = vpop.permute.xlu0 %183
    %vm185 = vcmask 704104
    %s186 = scalar_lea.vmem [#allocation0], 16
    %187 = vst.msk [vmem:[%s186] sm:$0x1] %vm185, %v184
    %s188 = scalar_lea.vmem %s0, 51
    %v189 = vld [vmem:[%s188] sm:$0x1]
    %190 = vrot.lane.b32.xlu0 %v189, 75
    %v191 = vpop.permute.xlu0 %190
    %vm192 = vcmask 687704
    %s193 = scalar_lea.vmem [#allocation0], 24
    %194 = vst.msk [vmem:[%s193] sm:$0x1] %vm192, %v191
    %s195 = scalar_lea.vmem %s0, 8
    %v196 = vld [vmem:[%s195] sm:$0x1]
    %197 = vrot.lane.b32.xlu0 %v196, 72
    %v198 = vpop.permute.xlu0 %197
    %vm199 = vcmask 663104
    %200 = vst.msk [vmem:[#allocation0] sm:$0x1] %vm199, %v198
    %s201 = scalar_lea.vmem %s0, 22
    %v202 = vld [vmem:[%s201] sm:$0x1]
    %203 = vrot.lane.b32.xlu0 %v202, 70
    %v204 = vpop.permute.xlu0 %203
    %vm205 = vcmask 646704
    %s206 = scalar_lea.vmem [#allocation0], 8
    %207 = vst.msk [vmem:[%s206] sm:$0x1] %vm205, %v204
    %s208 = scalar_lea.vmem %s0, 36
    %v209 = vld [vmem:[%s208] sm:$0x1]
    %210 = vrot.lane.b32.xlu0 %v209, 68
    %v211 = vpop.permute.xlu0 %210
    %vm212 = vcmask 630304
    %s213 = scalar_lea.vmem [#allocation0], 16
    %214 = vst.msk [vmem:[%s213] sm:$0x1] %vm212, %v211
    %s215 = scalar_lea.vmem %s0, 50
    %v216 = vld [vmem:[%s215] sm:$0x1]
    %217 = vrot.lane.b32.xlu0 %v216, 66
    %v218 = vpop.permute.xlu0 %217
    %vm219 = vcmask 613904
    %s220 = scalar_lea.vmem [#allocation0], 24
    %221 = vst.msk [vmem:[%s220] sm:$0x1] %vm219, %v218
    %s222 = scalar_lea.vmem %s0, 7
    %v223 = vld [vmem:[%s222] sm:$0x1]
    %224 = vrot.lane.b32.xlu0 %v223, 63
    %v225 = vpop.permute.xlu0 %224
    %vm226 = vcmask 589304
    %227 = vst.msk [vmem:[#allocation0] sm:$0x1] %vm226, %v225
    %s228 = scalar_lea.vmem %s0, 21
    %v229 = vld [vmem:[%s228] sm:$0x1]
    %230 = vrot.lane.b32.xlu0 %v229, 61
    %v231 = vpop.permute.xlu0 %230
    %vm232 = vcmask 572904
    %s233 = scalar_lea.vmem [#allocation0], 8
    %234 = vst.msk [vmem:[%s233] sm:$0x1] %vm232, %v231
    %s235 = scalar_lea.vmem %s0, 35
    %v236 = vld [vmem:[%s235] sm:$0x1]
    %237 = vrot.lane.b32.xlu0 %v236, 59
    %v238 = vpop.permute.xlu0 %237
    %vm239 = vcmask 556504
    %s240 = scalar_lea.vmem [#allocation0], 16
    %241 = vst.msk [vmem:[%s240] sm:$0x1] %vm239, %v238
    %s242 = scalar_lea.vmem %s0, 49
    %v243 = vld [vmem:[%s242] sm:$0x1]
    %244 = vrot.lane.b32.xlu0 %v243, 57
    %v245 = vpop.permute.xlu0 %244
    %vm246 = vcmask 540104
    %s247 = scalar_lea.vmem [#allocation0], 24
    %248 = vst.msk [vmem:[%s247] sm:$0x1] %vm246, %v245
    %s249 = scalar_lea.vmem %s0, 63
    %v250 = vld [vmem:[%s249] sm:$0x1]
    %251 = vrot.lane.b32.xlu0 %v250, 55
    %v252 = vpop.permute.xlu0 %251
    %vm253 = vcmask 523704
    %s254 = scalar_lea.vmem [#allocation0], 32
    %255 = vst.msk [vmem:[%s254] sm:$0x1] %vm253, %v252
    %s256 = scalar_lea.vmem %s0, 6
    %v257 = vld [vmem:[%s256] sm:$0x1]
    %258 = vrot.lane.b32.xlu0 %v257, 54
    %v259 = vpop.permute.xlu0 %258
    %vm260 = vcmask 515504
    %261 = vst.msk [vmem:[#allocation0] sm:$0x1] %vm260, %v259
    %s262 = scalar_lea.vmem %s0, 20
    %v263 = vld [vmem:[%s262] sm:$0x1]
    %264 = vrot.lane.b32.xlu0 %v263, 52
    %v265 = vpop.permute.xlu0 %264
    %vm266 = vcmask 499104
    %s267 = scalar_lea.vmem [#allocation0], 8
    %268 = vst.msk [vmem:[%s267] sm:$0x1] %vm266, %v265
    %s269 = scalar_lea.vmem %s0, 34
    %v270 = vld [vmem:[%s269] sm:$0x1]
    %271 = vrot.lane.b32.xlu0 %v270, 50
    %v272 = vpop.permute.xlu0 %271
    %vm273 = vcmask 482704
    %s274 = scalar_lea.vmem [#allocation0], 16
    %275 = vst.msk [vmem:[%s274] sm:$0x1] %vm273, %v272
    %s276 = scalar_lea.vmem %s0, 48
    %v277 = vld [vmem:[%s276] sm:$0x1]
    %278 = vrot.lane.b32.xlu0 %v277, 48
    %v279 = vpop.permute.xlu0 %278
    %vm280 = vcmask 466304
    %s281 = scalar_lea.vmem [#allocation0], 24
    %282 = vst.msk [vmem:[%s281] sm:$0x1] %vm280, %v279
    %s283 = scalar_lea.vmem %s0, 62
    %v284 = vld [vmem:[%s283] sm:$0x1]
    %285 = vrot.lane.b32.xlu0 %v284, 46
    %v286 = vpop.permute.xlu0 %285
    %vm287 = vcmask 449904
    %s288 = scalar_lea.vmem [#allocation0], 32
    %289 = vst.msk [vmem:[%s288] sm:$0x1] %vm287, %v286
    %s290 = scalar_lea.vmem %s0, 5
    %v291 = vld [vmem:[%s290] sm:$0x1]
    %292 = vrot.lane.b32.xlu0 %v291, 45
    %v293 = vpop.permute.xlu0 %292
    %vm294 = vcmask 441704
    %295 = vst.msk [vmem:[#allocation0] sm:$0x1] %vm294, %v293
    %s296 = scalar_lea.vmem %s0, 19
    %v297 = vld [vmem:[%s296] sm:$0x1]
    %298 = vrot.lane.b32.xlu0 %v297, 43
    %v299 = vpop.permute.xlu0 %298
    %vm300 = vcmask 425304
    %s301 = scalar_lea.vmem [#allocation0], 8
    %302 = vst.msk [vmem:[%s301] sm:$0x1] %vm300, %v299
    %s303 = scalar_lea.vmem %s0, 33
    %v304 = vld [vmem:[%s303] sm:$0x1]
    %305 = vrot.lane.b32.xlu0 %v304, 41
    %v306 = vpop.permute.xlu0 %305
    %vm307 = vcmask 408904
    %s308 = scalar_lea.vmem [#allocation0], 16
    %309 = vst.msk [vmem:[%s308] sm:$0x1] %vm307, %v306
    %s310 = scalar_lea.vmem %s0, 47
    %v311 = vld [vmem:[%s310] sm:$0x1]
    %312 = vrot.lane.b32.xlu0 %v311, 39
    %v313 = vpop.permute.xlu0 %312
    %vm314 = vcmask 392504
    %s315 = scalar_lea.vmem [#allocation0], 24
    %316 = vst.msk [vmem:[%s315] sm:$0x1] %vm314, %v313
    %s317 = scalar_lea.vmem %s0, 61
    %v318 = vld [vmem:[%s317] sm:$0x1]
    %319 = vrot.lane.b32.xlu0 %v318, 37
    %v320 = vpop.permute.xlu0 %319
    %vm321 = vcmask 376104
    %s322 = scalar_lea.vmem [#allocation0], 32
    %323 = vst.msk [vmem:[%s322] sm:$0x1] %vm321, %v320
    %s324 = scalar_lea.vmem %s0, 4
    %v325 = vld [vmem:[%s324] sm:$0x1]
    %326 = vrot.lane.b32.xlu0 %v325, 36
    %v327 = vpop.permute.xlu0 %326
    %vm328 = vcmask 367904
    %329 = vst.msk [vmem:[#allocation0] sm:$0x1] %vm328, %v327
    %s330 = scalar_lea.vmem %s0, 18
    %v331 = vld [vmem:[%s330] sm:$0x1]
    %332 = vrot.lane.b32.xlu0 %v331, 34
    %v333 = vpop.permute.xlu0 %332
    %vm334 = vcmask 351504
    %s335 = scalar_lea.vmem [#allocation0], 8
    %336 = vst.msk [vmem:[%s335] sm:$0x1] %vm334, %v333
    %s337 = scalar_lea.vmem %s0, 32
    %v338 = vld [vmem:[%s337] sm:$0x1]
    %339 = vrot.lane.b32.xlu0 %v338, 32
    %v340 = vpop.permute.xlu0 %339
    %vm341 = vcmask 335104
    %s342 = scalar_lea.vmem [#allocation0], 16
    %343 = vst.msk [vmem:[%s342] sm:$0x1] %vm341, %v340
    %s344 = scalar_lea.vmem %s0, 46
    %v345 = vld [vmem:[%s344] sm:$0x1]
    %346 = vrot.lane.b32.xlu0 %v345, 30
    %v347 = vpop.permute.xlu0 %346
    %vm348 = vcmask 318704
    %s349 = scalar_lea.vmem [#allocation0], 24
    %350 = vst.msk [vmem:[%s349] sm:$0x1] %vm348, %v347
    %s351 = scalar_lea.vmem %s0, 60
    %v352 = vld [vmem:[%s351] sm:$0x1]
    %353 = vrot.lane.b32.xlu0 %v352, 28
    %v354 = vpop.permute.xlu0 %353
    %vm355 = vcmask 302304
    %s356 = scalar_lea.vmem [#allocation0], 32
    %357 = vst.msk [vmem:[%s356] sm:$0x1] %vm355, %v354
    %s358 = scalar_lea.vmem %s0, 3
    %v359 = vld [vmem:[%s358] sm:$0x1]
    %360 = vrot.lane.b32.xlu0 %v359, 27
    %v361 = vpop.permute.xlu0 %360
    %vm362 = vcmask 294104
    %363 = vst.msk [vmem:[#allocation0] sm:$0x1] %vm362, %v361
    %s364 = scalar_lea.vmem %s0, 17
    %v365 = vld [vmem:[%s364] sm:$0x1]
    %366 = vrot.lane.b32.xlu0 %v365, 25
    %v367 = vpop.permute.xlu0 %366
    %vm368 = vcmask 277704
    %s369 = scalar_lea.vmem [#allocation0], 8
    %370 = vst.msk [vmem:[%s369] sm:$0x1] %vm368, %v367
    %s371 = scalar_lea.vmem %s0, 31
    %v372 = vld [vmem:[%s371] sm:$0x1]
    %373 = vrot.lane.b32.xlu0 %v372, 23
    %v374 = vpop.permute.xlu0 %373
    %vm375 = vcmask 261304
    %s376 = scalar_lea.vmem [#allocation0], 16
    %377 = vst.msk [vmem:[%s376] sm:$0x1] %vm375, %v374
    %s378 = scalar_lea.vmem %s0, 45
    %v379 = vld [vmem:[%s378] sm:$0x1]
    %380 = vrot.lane.b32.xlu0 %v379, 21
    %v381 = vpop.permute.xlu0 %380
    %vm382 = vcmask 244904
    %s383 = scalar_lea.vmem [#allocation0], 24
    %384 = vst.msk [vmem:[%s383] sm:$0x1] %vm382, %v381
    %s385 = scalar_lea.vmem %s0, 59
    %v386 = vld [vmem:[%s385] sm:$0x1]
    %387 = vrot.lane.b32.xlu0 %v386, 19
    %v388 = vpop.permute.xlu0 %387
    %vm389 = vcmask 228504
    %s390 = scalar_lea.vmem [#allocation0], 32
    %391 = vst.msk [vmem:[%s390] sm:$0x1] %vm389, %v388
    %s392 = scalar_lea.vmem %s0, 2
    %v393 = vld [vmem:[%s392] sm:$0x1]
    %394 = vrot.lane.b32.xlu0 %v393, 18
    %v395 = vpop.permute.xlu0 %394
    %vm396 = vcmask 220304
    %397 = vst.msk [vmem:[#allocation0] sm:$0x1] %vm396, %v395
    %s398 = scalar_lea.vmem %s0, 16
    %v399 = vld [vmem:[%s398] sm:$0x1]
    %400 = vrot.lane.b32.xlu0 %v399, 16
    %v401 = vpop.permute.xlu0 %400
    %vm402 = vcmask 203904
    %s403 = scalar_lea.vmem [#allocation0], 8
    %404 = vst.msk [vmem:[%s403] sm:$0x1] %vm402, %v401
    %s405 = scalar_lea.vmem %s0, 30
    %v406 = vld [vmem:[%s405] sm:$0x1]
    %407 = vrot.lane.b32.xlu0 %v406, 14
    %v408 = vpop.permute.xlu0 %407
    %vm409 = vcmask 187504
    %s410 = scalar_lea.vmem [#allocation0], 16
    %411 = vst.msk [vmem:[%s410] sm:$0x1] %vm409, %v408
    %s412 = scalar_lea.vmem %s0, 44
    %v413 = vld [vmem:[%s412] sm:$0x1]
    %414 = vrot.lane.b32.xlu0 %v413, 12
    %v415 = vpop.permute.xlu0 %414
    %vm416 = vcmask 171104
    %s417 = scalar_lea.vmem [#allocation0], 24
    %418 = vst.msk [vmem:[%s417] sm:$0x1] %vm416, %v415
    %s419 = scalar_lea.vmem %s0, 58
    %v420 = vld [vmem:[%s419] sm:$0x1]
    %421 = vrot.lane.b32.xlu0 %v420, 10
    %v422 = vpop.permute.xlu0 %421
    %vm423 = vcmask 154704
    %s424 = scalar_lea.vmem [#allocation0], 32
    %425 = vst.msk [vmem:[%s424] sm:$0x1] %vm423, %v422
    %s426 = scalar_lea.vmem %s0, 1
    %v427 = vld [vmem:[%s426] sm:$0x1]
    %428 = vrot.lane.b32.xlu0 %v427, 9
    %v429 = vpop.permute.xlu0 %428
    %vm430 = vcmask 146504
    %431 = vst.msk [vmem:[#allocation0] sm:$0x1] %vm430, %v429
    %s432 = scalar_lea.vmem %s0, 15
    %v433 = vld [vmem:[%s432] sm:$0x1]
    %434 = vrot.lane.b32.xlu0 %v433, 7
    %v435 = vpop.permute.xlu0 %434
    %vm436 = vcmask 130104
    %s437 = scalar_lea.vmem [#allocation0], 8
    %438 = vst.msk [vmem:[%s437] sm:$0x1] %vm436, %v435
    %s439 = scalar_lea.vmem %s0, 29
    %v440 = vld [vmem:[%s439] sm:$0x1]
    %441 = vrot.lane.b32.xlu0 %v440, 5
    %v442 = vpop.permute.xlu0 %441
    %vm443 = vcmask 113704
    %s444 = scalar_lea.vmem [#allocation0], 16
    %445 = vst.msk [vmem:[%s444] sm:$0x1] %vm443, %v442
    %s446 = scalar_lea.vmem %s0, 43
    %v447 = vld [vmem:[%s446] sm:$0x1]
    %448 = vrot.lane.b32.xlu0 %v447, 3
    %v449 = vpop.permute.xlu0 %448
    %vm450 = vcmask 97304
    %s451 = scalar_lea.vmem [#allocation0], 24
    %452 = vst.msk [vmem:[%s451] sm:$0x1] %vm450, %v449
    %s453 = scalar_lea.vmem %s0, 57
    %v454 = vld [vmem:[%s453] sm:$0x1]
    %455 = vrot.lane.b32.xlu0 %v454, 1
    %v456 = vpop.permute.xlu0 %455
    %vm457 = vcmask 80904
    %s458 = scalar_lea.vmem [#allocation0], 32
    %459 = vst.msk [vmem:[%s458] sm:$0x1] %vm457, %v456
    %s461 = sshllo.u32 0, 1
    %v463 = vld [vmem:[#allocation0] sm:%s461]
    %s464 = sshllo.u32 0, 1
    %465 = vst [vmem:[%s1] sm:%s464] %v463
    %s466 = scalar_lea.vmem [#allocation0], 8
    %v467 = vld [vmem:[%s466] sm:%s461]
    %s468 = sshllo.u32 0, 1
    %s469 = scalar_lea.vmem %s1, 1
    %470 = vst [vmem:[%s469] sm:%s468] %v467
    %s471 = scalar_lea.vmem [#allocation0], 16
    %v472 = vld [vmem:[%s471] sm:%s461]
    %s473 = sshllo.u32 0, 1
    %s474 = smul.addr 1, 2
    %s475 = scalar_lea.vmem %s1, %s474
    %476 = vst [vmem:[%s475] sm:%s473] %v472
    %s477 = scalar_lea.vmem [#allocation0], 24
    %v478 = vld [vmem:[%s477] sm:%s461]
    %s479 = sshllo.u32 0, 1
    %s480 = smul.addr 1, 3
    %s481 = scalar_lea.vmem %s1, %s480
    %482 = vst [vmem:[%s481] sm:%s479] %v478
    %s483 = scalar_lea.vmem [#allocation0], 32
    %v484 = vld [vmem:[%s483] sm:%s461]
    %s485 = sshllo.u32 0, 1
    %s486 = smul.addr 1, 4
    %s487 = scalar_lea.vmem %s1, %s486
    %488 = vst [vmem:[%s487] sm:%s485] %v484

// kernel: general_fourier2d.1
$region0: #{general_fourier2d.1}
  #allocation0 [shape = 'u32[]', space=smem, size = 0x4, offset = 0x4, fixed_abs, tag = 'smem constant byte address 0x4 - core index']
  #allocation1 [shape = 'u32[144,128]{1,0:T(1,128)}', space=vmem, size = 0x12000, scoped, tag = 'internal scratch']
  %s0 = inlined_call_operand.vmem [shape: f32[2,8,128], index: 0, kind: input, shape index: {}, may-alias: {0,6}]
  %s1 = inlined_call_operand.vmem [shape: f32[2,8,128], index: 1, kind: input, shape index: {}, may-alias: {1,7}]
  %s2 = inlined_call_operand.vmem [shape: f32[1,8,128], index: 2, kind: input, shape index: {}]
  %s3 = inlined_call_operand.vmem [shape: f32[1,8,128], index: 3, kind: input, shape index: {}]
  %s4 = inlined_call_operand.vmem [shape: f32[1,8,128], index: 4, kind: input, shape index: {}]
  %s5 = inlined_call_operand.vmem [shape: f32[1,8,128], index: 5, kind: input, shape index: {}]
  %s6 = inlined_call_operand.vmem [shape: f32[2,8,128], index: 6, kind: output, shape index: {0}, may-alias: {0,6}]
  %s7 = inlined_call_operand.vmem [shape: f32[2,8,128], index: 7, kind: output, shape index: {1}, may-alias: {1,7}]
  %8 = xla_tuple %s6, %s7
  %s9 = sld [smem:[#allocation0]]
  $region42: #{general_fourier2d.1} parent=0
    _
  %s11 = ssub.s32 1, %s9
  %s12 = scalar_select 0, %s11, %s9
  // Predicated region
  $region2: #{general_fourier2d.1} parent=0 // pred_check
    _
  $region3: #{general_fourier2d.1} parent=0 // pred_check_branch
    %14 = sbr.rel (0) target = $region5
  $region4: #{general_fourier2d.1} parent=0 // pred_region
    _
  $region5: #{general_fourier2d.1} parent=0 // pred_fallthru
    _
  // Predicated region
  $region6: #{general_fourier2d.1} parent=0 // pred_check
    _
  $region7: #{general_fourier2d.1} parent=0 // pred_check_branch
    %16 = sbr.rel (0) target = $region9
  $region8: #{general_fourier2d.1} parent=0 // pred_region
    _
  $region9: #{general_fourier2d.1} parent=0 // pred_fallthru
    _
  // Predicated region
  $region10: #{general_fourier2d.1} parent=0 // pred_check
    _
  $region11: #{general_fourier2d.1} parent=0 // pred_check_branch
    %18 = sbr.rel (0) target = $region13
  $region12: #{general_fourier2d.1} parent=0 // pred_region
    _
  $region13: #{general_fourier2d.1} parent=0 // pred_fallthru
    _
  // Predicated region
  $region14: #{general_fourier2d.1} parent=0 // pred_check
    _
  $region15: #{general_fourier2d.1} parent=0 // pred_check_branch
    %20 = sbr.rel (0) target = $region17
  $region16: #{general_fourier2d.1} parent=0 // pred_region
    _
  $region17: #{general_fourier2d.1} parent=0 // pred_fallthru
    _
  // Predicated region
  $region18: #{general_fourier2d.1} parent=0 // pred_check
    _
  $region19: #{general_fourier2d.1} parent=0 // pred_check_branch
    %22 = sbr.rel (0) target = $region21
  $region20: #{general_fourier2d.1} parent=0 // pred_region
    _
  $region21: #{general_fourier2d.1} parent=0 // pred_fallthru
    _
  // Predicated region
  $region22: #{general_fourier2d.1} parent=0 // pred_check
    _
  $region23: #{general_fourier2d.1} parent=0 // pred_check_branch
    %24 = sbr.rel (0) target = $region25
  $region24: #{general_fourier2d.1} parent=0 // pred_region
    _
  $region25: #{general_fourier2d.1} parent=0 // pred_fallthru
    _
  %v25 = vld [vmem:[%s0] sm:$0xff]
  %v26 = vld [vmem:[%s0 + $0x8] sm:$0xff]
  %v27 = vld [vmem:[%s1] sm:$0xff]
  %v28 = vld [vmem:[%s1 + $0x8] sm:$0xff]
  %v29 = vld [vmem:[%s2] sm:$0xff]
  %v30 = vmax.f32 %v29, 0.0
  %v31 = vld [vmem:[%s3] sm:$0xff]
  %v32 = vmax.f32 %v31, 0.0
  %v33 = vld [vmem:[%s4] sm:$0xff]
  %v34 = vmax.f32 %v33, 0.0
  %v35 = vld [vmem:[%s5] sm:$0xff]
  %v36 = vmax.f32 %v35, 0.0
  %v37 = vmul.f32 %v25, %v25
  %v38 = vmul.f32 %v26, %v26
  %v39 = vmul.f32 %v27, %v27
  %v40 = vmul.f32 %v28, %v28
  %v41 = vadd.f32 %v37, %v39
  %v42 = vadd.f32 %v38, %v40
  %v43 = vadd.f32 %v41, 1e-30
  %v44 = vadd.f32 %v42, 1e-30
  %v45 = vrsqrt.pop %v43
  %v46 = vrsqrt.pop %v44
  %v47 = vmul.f32 %v41, %v45
  %v48 = vmul.f32 %v42, %v46
  %v49 = vmul.f32 %v30, %v47
  %v50 = vmul.f32 %v30, %v48
  %v51 = vadd.f32 %v49, %v32
  %v52 = vadd.f32 %v50, %v32
  %v53 = vmax.f32 %v51, 0.0
  %v54 = vmax.f32 %v52, 0.0
  %v55 = vmul.f32 %v34, %v53
  %v56 = vmul.f32 %v34, %v54
  %v57 = vadd.f32 %v55, %v36
  %v58 = vadd.f32 %v56, %v36
  %v59 = vmul.f32 %v57, %v45
  %v60 = vmul.f32 %v58, %v46
  %v61 = vmul.f32 %v25, %v59
  %v62 = vmul.f32 %v26, %v60
  %63 = vst [vmem:[%s6] sm:$0xff] %v61
  %64 = vst [vmem:[%s6 + $0x8] sm:$0xff] %v62
  %v65 = vmul.f32 %v27, %v59
  %v66 = vmul.f32 %v28, %v60
  %67 = vst [vmem:[%s7] sm:$0xff] %v65
  %68 = vst [vmem:[%s7 + $0x8] sm:$0xff] %v66
  // Predicated region
  $region26: #{general_fourier2d.1} parent=0 // pred_check
    _
  $region27: #{general_fourier2d.1} parent=0 // pred_check_branch
    %70 = sbr.rel (0) target = $region29
  $region28: #{general_fourier2d.1} parent=0 // pred_region
    _
  $region29: #{general_fourier2d.1} parent=0 // pred_fallthru
    _
  // Predicated region
  $region30: #{general_fourier2d.1} parent=0 // pred_check
    _
  $region31: #{general_fourier2d.1} parent=0 // pred_check_branch
    %72 = sbr.rel (0) target = $region33
  $region32: #{general_fourier2d.1} parent=0 // pred_region
    _
  $region33: #{general_fourier2d.1} parent=0 // pred_fallthru
    _
  // Predicated region
  $region34: #{general_fourier2d.1} parent=0 // pred_check
    _
  $region35: #{general_fourier2d.1} parent=0 // pred_check_branch
    %74 = sbr.rel (0) target = $region37
  $region36: #{general_fourier2d.1} parent=0 // pred_region
    _
  $region37: #{general_fourier2d.1} parent=0 // pred_fallthru
    _
  // Predicated region
  $region38: #{general_fourier2d.1} parent=0 // pred_check
    _
  $region39: #{general_fourier2d.1} parent=0 // pred_check_branch
    %76 = sbr.rel (0) target = $region41
  $region40: #{general_fourier2d.1} parent=0 // pred_region
    _
  $region41: #{general_fourier2d.1} parent=0 // pred_fallthru
    _

// kernel: reverse.0
$region0: #{reverse.0}
  %s0 = inlined_call_operand.vmem [shape: f32[2,4,16,7], index: 0, kind: input, shape index: {}]
  %s1 = inlined_call_operand.vmem [shape: f32[2,4,16,7], index: 1, kind: output, shape index: {}]
  $region1: #{reverse.0} parent=0
    #allocation0 [shape = 'u8[65536]{0}', space=vmem, size = 0x10000, scoped, tag = 'operand span for operand 0']
    #allocation1 [shape = 'u8[32768]{0}', space=vmem, size = 0x8000, scoped, tag = 'operand span for operand 1']
    %s2 = scalar_lea.vmem [#allocation0], 8
    // Predicated region
    $region2: #{reverse.0} parent=1 // pred_check
      _
    $region3: #{reverse.0} parent=1 // pred_check_branch
      %4 = sbr.rel (0) target = $region5
    $region4: #{reverse.0} parent=1 // pred_region
      // Predicated region
      $region6: #{reverse.0} parent=4 // pred_check
        _
      $region7: #{reverse.0} parent=4 // pred_check_branch
        %6 = sbr.rel (0) target = $region9
      $region8: #{reverse.0} parent=4 // pred_region
        // Predicated region
        $region21: #{reverse.0} parent=8 // pred_check
          _
        $region22: #{reverse.0} parent=8 // pred_check_branch
          %35 = sbr.rel (0) target = $region24
        $region23: #{reverse.0} parent=8 // pred_region
          loop: start=0, step=1, limit=1
          $region25: #{reverse.0} parent=23 // loop_pre_header
            _
          $region26: #{reverse.0} parent=23 // loop_header
            %s37 = sphi 0, %s41
            %p38 = scmp.ge.s32.totalorder %s37, 1
            %s42 = sphi %s0, %s0
            %s43 = sphi %s2, %s2
          $region27: #{reverse.0} parent=23 // loop_header_branch
            %40 = sbr.rel (%p38) target = $region31
          $region28: #{reverse.0} parent=23 // loop_body
            %v44 = vld [vmem:[%s42] sm:$0xff]
            %45 = vst [vmem:[%s43] sm:$0xff] %v44
            %v46 = vld [vmem:[%s42 + $0x8] sm:$0xff]
            %47 = vst [vmem:[%s43 + $0x10] sm:$0xff] %v46
            %v48 = vld [vmem:[%s42 + $0x10] sm:$0xff]
            %49 = vst [vmem:[%s43 + $0x20] sm:$0xff] %v48
            %v50 = vld [vmem:[%s42 + $0x18] sm:$0xff]
            %51 = vst [vmem:[%s43 + $0x30] sm:$0xff] %v50
            %v52 = vld [vmem:[%s42 + $0x20] sm:$0xff]
            %53 = vst [vmem:[%s43 + $0x40] sm:$0xff] %v52
            %v54 = vld [vmem:[%s42 + $0x28] sm:$0xff]
            %55 = vst [vmem:[%s43 + $0x50] sm:$0xff] %v54
            %v56 = vld [vmem:[%s42 + $0x30] sm:$0xff]
            %57 = vst [vmem:[%s43 + $0x60] sm:$0xff] %v56
            %v58 = vld [vmem:[%s42 + $0x38] sm:$0xff]
            %59 = vst [vmem:[%s43 + $0x70] sm:$0xff] %v58
          $region29: #{reverse.0} parent=23 // loop_footer
            %s41 = sadd.s32 1, %s37
          $region30: #{reverse.0} parent=23 // loop_footer_branch
            %36 = sbr.rel target = $region26
          $region31: #{reverse.0} parent=23 // loop_exit
            _
        $region24: #{reverse.0} parent=8 // pred_fallthru
          _
        // Predicated region
        $region32: #{reverse.0} parent=8 // pred_check
          _
        $region33: #{reverse.0} parent=8 // pred_check_branch
          %61 = sbr.rel target = $region35
        $region34: #{reverse.0} parent=8 // pred_region
          _
        $region35: #{reverse.0} parent=8 // pred_fallthru
          _
      $region9: #{reverse.0} parent=4 // pred_fallthru
        _
      // Predicated region
      $region10: #{reverse.0} parent=4 // pred_check
        _
      $region11: #{reverse.0} parent=4 // pred_check_branch
        %8 = sbr.rel target = $region13
      $region12: #{reverse.0} parent=4 // pred_region
        loop: start=0, step=1, limit=1
        $region14: #{reverse.0} parent=12 // loop_pre_header
          _
        $region15: #{reverse.0} parent=12 // loop_header
          %s11 = sphi 0, %s15
          %p12 = scmp.ge.s32.totalorder %s11, 1
          %s16 = sphi %s0, %s0
          %s17 = sphi %s2, %s2
        $region16: #{reverse.0} parent=12 // loop_header_branch
          %14 = sbr.rel (%p12) target = $region20
        $region17: #{reverse.0} parent=12 // loop_body
          %v18 = vld [vmem:[%s16] sm:$0xff]
          %19 = vst [vmem:[%s17] sm:$0xff] %v18
          %v20 = vld [vmem:[%s16 + $0x8] sm:$0xff]
          %21 = vst [vmem:[%s17 + $0x10] sm:$0xff] %v20
          %v22 = vld [vmem:[%s16 + $0x10] sm:$0xff]
          %23 = vst [vmem:[%s17 + $0x20] sm:$0xff] %v22
          %v24 = vld [vmem:[%s16 + $0x18] sm:$0xff]
          %25 = vst [vmem:[%s17 + $0x30] sm:$0xff] %v24
          %v26 = vld [vmem:[%s16 + $0x20] sm:$0xff]
          %27 = vst [vmem:[%s17 + $0x40] sm:$0xff] %v26
          %v28 = vld [vmem:[%s16 + $0x28] sm:$0xff]
          %29 = vst [vmem:[%s17 + $0x50] sm:$0xff] %v28
          %v30 = vld [vmem:[%s16 + $0x30] sm:$0xff]
          %31 = vst [vmem:[%s17 + $0x60] sm:$0xff] %v30
          %v32 = vld [vmem:[%s16 + $0x38] sm:$0xff]
          %33 = vst [vmem:[%s17 + $0x70] sm:$0xff] %v32
        $region18: #{reverse.0} parent=12 // loop_footer
          %s15 = sadd.s32 1, %s11
        $region19: #{reverse.0} parent=12 // loop_footer_branch
          %10 = sbr.rel target = $region15
        $region20: #{reverse.0} parent=12 // loop_exit
          _
      $region13: #{reverse.0} parent=4 // pred_fallthru
        _
    $region5: #{reverse.0} parent=1 // pred_fallthru
      _
    %62 = vnop
    %s63 = scalar_lea.vmem [#allocation0], 7
    %v64 = vld [vmem:[%s63] ss:$-1 sm:$0xff]
    %v65 = vrot.slane %v64, 1
    %66 = vst [vmem:[#allocation1] sm:$0xff] %v65
    %s67 = scalar_lea.vmem [#allocation0], 8
    %s68 = scalar_lea.vmem %s67, 7 [#allocation0]
    %v69 = vld [vmem:[%s68] ss:$-1 sm:$0xff]
    %v70 = vrot.slane %v69, 1
    %v71 = vlaneseq
    %v72 = vshrl.u32 %v71, 7
    %vm73 = vcmp.lt.s32.totalorder %v72, 7
    %74 = vst.msk [vmem:[#allocation1] sm:$0xff] %vm73, %v70
    %s75 = scalar_lea.vmem [#allocation1], 8
    %s76 = scalar_lea.vmem [#allocation0], 16
    %s77 = scalar_lea.vmem %s76, 7 [#allocation0]
    %v78 = vld [vmem:[%s77] ss:$-1 sm:$0xff]
    %v79 = vrot.slane %v78, 1
    %80 = vst [vmem:[%s75] sm:$0xff] %v79
    %s81 = scalar_lea.vmem %s76, 8 [#allocation0]
    %s82 = scalar_lea.vmem %s81, 7 [#allocation0]
    %v83 = vld [vmem:[%s82] ss:$-1 sm:$0xff]
    %v84 = vrot.slane %v83, 1
    %v85 = vlaneseq
    %v86 = vshrl.u32 %v85, 7
    %vm87 = vcmp.lt.s32.totalorder %v86, 7
    %88 = vst.msk [vmem:[%s75] sm:$0xff] %vm87, %v84
    %s89 = scalar_lea.vmem [#allocation1], 16
    %s90 = scalar_lea.vmem [#allocation0], 32
    %s91 = scalar_lea.vmem %s90, 7 [#allocation0]
    %v92 = vld [vmem:[%s91] ss:$-1 sm:$0xff]
    %v93 = vrot.slane %v92, 1
    %94 = vst [vmem:[%s89] sm:$0xff] %v93
    %s95 = scalar_lea.vmem %s90, 8 [#allocation0]
    %s96 = scalar_lea.vmem %s95, 7 [#allocation0]
    %v97 = vld [vmem:[%s96] ss:$-1 sm:$0xff]
    %v98 = vrot.slane %v97, 1
    %v99 = vlaneseq
    %v100 = vshrl.u32 %v99, 7
    %vm101 = vcmp.lt.s32.totalorder %v100, 7
    %102 = vst.msk [vmem:[%s89] sm:$0xff] %vm101, %v98
    %s103 = scalar_lea.vmem [#allocation1], 24
    %s104 = scalar_lea.vmem [#allocation0], 48
    %s105 = scalar_lea.vmem %s104, 7 [#allocation0]
    %v106 = vld [vmem:[%s105] ss:$-1 sm:$0xff]
    %v107 = vrot.slane %v106, 1
    %108 = vst [vmem:[%s103] sm:$0xff] %v107
    %s109 = scalar_lea.vmem %s104, 8 [#allocation0]
    %s110 = scalar_lea.vmem %s109, 7 [#allocation0]
    %v111 = vld [vmem:[%s110] ss:$-1 sm:$0xff]
    %v112 = vrot.slane %v111, 1
    %v113 = vlaneseq
    %v114 = vshrl.u32 %v113, 7
    %vm115 = vcmp.lt.s32.totalorder %v114, 7
    %116 = vst.msk [vmem:[%s103] sm:$0xff] %vm115, %v112
    %s117 = scalar_lea.vmem [#allocation1], 32
    %s118 = scalar_lea.vmem [#allocation0], 64
    %s119 = scalar_lea.vmem %s118, 7 [#allocation0]
    %v120 = vld [vmem:[%s119] ss:$-1 sm:$0xff]
    %v121 = vrot.slane %v120, 1
    %122 = vst [vmem:[%s117] sm:$0xff] %v121
    %s123 = scalar_lea.vmem %s118, 8 [#allocation0]
    %s124 = scalar_lea.vmem %s123, 7 [#allocation0]
    %v125 = vld [vmem:[%s124] ss:$-1 sm:$0xff]
    %v126 = vrot.slane %v125, 1
    %v127 = vlaneseq
    %v128 = vshrl.u32 %v127, 7
    %vm129 = vcmp.lt.s32.totalorder %v128, 7
    %130 = vst.msk [vmem:[%s117] sm:$0xff] %vm129, %v126
    %s131 = scalar_lea.vmem [#allocation1], 40
    %s132 = scalar_lea.vmem [#allocation0], 80
    %s133 = scalar_lea.vmem %s132, 7 [#allocation0]
    %v134 = vld [vmem:[%s133] ss:$-1 sm:$0xff]
    %v135 = vrot.slane %v134, 1
    %136 = vst [vmem:[%s131] sm:$0xff] %v135
    %s137 = scalar_lea.vmem %s132, 8 [#allocation0]
    %s138 = scalar_lea.vmem %s137, 7 [#allocation0]
    %v139 = vld [vmem:[%s138] ss:$-1 sm:$0xff]
    %v140 = vrot.slane %v139, 1
    %v141 = vlaneseq
    %v142 = vshrl.u32 %v141, 7
    %vm143 = vcmp.lt.s32.totalorder %v142, 7
    %144 = vst.msk [vmem:[%s131] sm:$0xff] %vm143, %v140
    %s145 = scalar_lea.vmem [#allocation1], 48
    %s146 = scalar_lea.vmem [#allocation0], 96
    %s147 = scalar_lea.vmem %s146, 7 [#allocation0]
    %v148 = vld [vmem:[%s147] ss:$-1 sm:$0xff]
    %v149 = vrot.slane %v148, 1
    %150 = vst [vmem:[%s145] sm:$0xff] %v149
    %s151 = scalar_lea.vmem %s146, 8 [#allocation0]
    %s152 = scalar_lea.vmem %s151, 7 [#allocation0]
    %v153 = vld [vmem:[%s152] ss:$-1 sm:$0xff]
    %v154 = vrot.slane %v153, 1
    %v155 = vlaneseq
    %v156 = vshrl.u32 %v155, 7
    %vm157 = vcmp.lt.s32.totalorder %v156, 7
    %158 = vst.msk [vmem:[%s145] sm:$0xff] %vm157, %v154
    %s159 = scalar_lea.vmem [#allocation1], 56
    %s160 = scalar_lea.vmem [#allocation0], 112
    %s161 = scalar_lea.vmem %s160, 7 [#allocation0]
    %v162 = vld [vmem:[%s161] ss:$-1 sm:$0xff]
    %v163 = vrot.slane %v162, 1
    %164 = vst [vmem:[%s159] sm:$0xff] %v163
    %s165 = scalar_lea.vmem %s160, 8 [#allocation0]
    %s166 = scalar_lea.vmem %s165, 7 [#allocation0]
    %v167 = vld [vmem:[%s166] ss:$-1 sm:$0xff]
    %v168 = vrot.slane %v167, 1
    %v169 = vlaneseq
    %v170 = vshrl.u32 %v169, 7
    %vm171 = vcmp.lt.s32.totalorder %v170, 7
    %172 = vst.msk [vmem:[%s159] sm:$0xff] %vm171, %v168
    // Predicated region
    $region36: #{reverse.0} parent=1 // pred_check
      _
    $region37: #{reverse.0} parent=1 // pred_check_branch
      %174 = sbr.rel (0) target = $region39
    $region38: #{reverse.0} parent=1 // pred_region
      // Predicated region
      $region40: #{reverse.0} parent=38 // pred_check
        _
      $region41: #{reverse.0} parent=38 // pred_check_branch
        %176 = sbr.rel (0) target = $region43
      $region42: #{reverse.0} parent=38 // pred_region
        // Predicated region
        $region55: #{reverse.0} parent=42 // pred_check
          _
        $region56: #{reverse.0} parent=42 // pred_check_branch
          %205 = sbr.rel (0) target = $region58
        $region57: #{reverse.0} parent=42 // pred_region
          loop: start=0, step=1, limit=1
          $region59: #{reverse.0} parent=57 // loop_pre_header
            _
          $region60: #{reverse.0} parent=57 // loop_header
            %s207 = sphi 0, %s211
            %p208 = scmp.ge.s32.totalorder %s207, 1
            %s212 = sphi [#allocation1], [#allocation1]
            %s213 = sphi %s1, %s1
          $region61: #{reverse.0} parent=57 // loop_header_branch
            %210 = sbr.rel (%p208) target = $region65
          $region62: #{reverse.0} parent=57 // loop_body
            %v214 = vld [vmem:[%s212] sm:$0xff]
            %215 = vst [vmem:[%s213] sm:$0xff] %v214
            %v216 = vld [vmem:[%s212 + $0x8] sm:$0xff]
            %217 = vst [vmem:[%s213 + $0x8] sm:$0xff] %v216
            %v218 = vld [vmem:[%s212 + $0x10] sm:$0xff]
            %219 = vst [vmem:[%s213 + $0x10] sm:$0xff] %v218
            %v220 = vld [vmem:[%s212 + $0x18] sm:$0xff]
            %221 = vst [vmem:[%s213 + $0x18] sm:$0xff] %v220
            %v222 = vld [vmem:[%s212 + $0x20] sm:$0xff]
            %223 = vst [vmem:[%s213 + $0x20] sm:$0xff] %v222
            %v224 = vld [vmem:[%s212 + $0x28] sm:$0xff]
            %225 = vst [vmem:[%s213 + $0x28] sm:$0xff] %v224
            %v226 = vld [vmem:[%s212 + $0x30] sm:$0xff]
            %227 = vst [vmem:[%s213 + $0x30] sm:$0xff] %v226
            %v228 = vld [vmem:[%s212 + $0x38] sm:$0xff]
            %229 = vst [vmem:[%s213 + $0x38] sm:$0xff] %v228
          $region63: #{reverse.0} parent=57 // loop_footer
            %s211 = sadd.s32 1, %s207
          $region64: #{reverse.0} parent=57 // loop_footer_branch
            %206 = sbr.rel target = $region60
          $region65: #{reverse.0} parent=57 // loop_exit
            _
        $region58: #{reverse.0} parent=42 // pred_fallthru
          _
        // Predicated region
        $region66: #{reverse.0} parent=42 // pred_check
          _
        $region67: #{reverse.0} parent=42 // pred_check_branch
          %231 = sbr.rel target = $region69
        $region68: #{reverse.0} parent=42 // pred_region
          _
        $region69: #{reverse.0} parent=42 // pred_fallthru
          _
      $region43: #{reverse.0} parent=38 // pred_fallthru
        _
      // Predicated region
      $region44: #{reverse.0} parent=38 // pred_check
        _
      $region45: #{reverse.0} parent=38 // pred_check_branch
        %178 = sbr.rel target = $region47
      $region46: #{reverse.0} parent=38 // pred_region
        loop: start=0, step=1, limit=1
        $region48: #{reverse.0} parent=46 // loop_pre_header
          _
        $region49: #{reverse.0} parent=46 // loop_header
          %s181 = sphi 0, %s185
          %p182 = scmp.ge.s32.totalorder %s181, 1
          %s186 = sphi [#allocation1], [#allocation1]
          %s187 = sphi %s1, %s1
        $region50: #{reverse.0} parent=46 // loop_header_branch
          %184 = sbr.rel (%p182) target = $region54
        $region51: #{reverse.0} parent=46 // loop_body
          %v188 = vld [vmem:[%s186] sm:$0xff]
          %189 = vst [vmem:[%s187] sm:$0xff] %v188
          %v190 = vld [vmem:[%s186 + $0x8] sm:$0xff]
          %191 = vst [vmem:[%s187 + $0x8] sm:$0xff] %v190
          %v192 = vld [vmem:[%s186 + $0x10] sm:$0xff]
          %193 = vst [vmem:[%s187 + $0x10] sm:$0xff] %v192
          %v194 = vld [vmem:[%s186 + $0x18] sm:$0xff]
          %195 = vst [vmem:[%s187 + $0x18] sm:$0xff] %v194
          %v196 = vld [vmem:[%s186 + $0x20] sm:$0xff]
          %197 = vst [vmem:[%s187 + $0x20] sm:$0xff] %v196
          %v198 = vld [vmem:[%s186 + $0x28] sm:$0xff]
          %199 = vst [vmem:[%s187 + $0x28] sm:$0xff] %v198
          %v200 = vld [vmem:[%s186 + $0x30] sm:$0xff]
          %201 = vst [vmem:[%s187 + $0x30] sm:$0xff] %v200
          %v202 = vld [vmem:[%s186 + $0x38] sm:$0xff]
          %203 = vst [vmem:[%s187 + $0x38] sm:$0xff] %v202
        $region52: #{reverse.0} parent=46 // loop_footer
          %s185 = sadd.s32 1, %s181
        $region53: #{reverse.0} parent=46 // loop_footer_branch
          %180 = sbr.rel target = $region49
        $region54: #{reverse.0} parent=46 // loop_exit
          _
      $region47: #{reverse.0} parent=38 // pred_fallthru
        _
    $region39: #{reverse.0} parent=1 // pred_fallthru
      _
    %232 = vnop

</llo_original>
